<compile_context>
chip_gen: v7x
topology: tpu7x:2x2x1
jax: 0.10.0
libtpu: 0.0.40
codegen_flags: <defaults>
</compile_context>

<pallas_src>
import functools

import jax
import jax.numpy as jnp
from jax.experimental import pallas as pl
from jax.experimental.pallas import tpu as pltpu

_LANE = 128
_SUBLANE = 8


def _round_up(x, m):
    return (x + m - 1) // m * m


def _pad2d(a, rows, cols):
    r, c = a.shape
    if r == rows and c == cols:
        return a
    return jnp.pad(a, ((0, rows - r), (0, cols - c)))


def _make_engen_kernel(n_enc_lin, n_dec_lin):
    """Fused EnGen forward kernel.

    Kernel refs:
      (x_ref,
       enc_w0, enc_b0, ..., enc_w{n_enc_lin-1}, enc_b{n_enc_lin-1},
       bn_scale, bn_shift,
       dec_w0, dec_b0, ..., dec_w{n_dec_lin-1}, dec_b{n_dec_lin-1},
       recon_ref, z_ref)
    """

    def kernel(x_ref, *refs):
        recon_ref, z_ref = refs[-2], refs[-1]
        params = refs[:-2]
        idx = 0

        x = x_ref[...]

        # ---- Encoder: Linear + LeakyReLU(0.1) after every hidden linear,
        #      final 'Z' linear has no activation.
        for i in range(n_enc_lin):
            w = params[idx][...]
            b = params[idx + 1][...].astype(jnp.float32)
            idx += 2
            x = jnp.dot(x.astype(w.dtype), w,
                        preferred_element_type=jnp.float32) + b
            if i + 1 < n_enc_lin:
                x = jnp.maximum(x, 0.1 * x)     # LeakyReLU(0.1)

        # ---- BatchNorm1d (eval mode), folded into scale/shift (f32).
        bn_scale = params[idx][...].astype(jnp.float32)
        bn_shift = params[idx + 1][...].astype(jnp.float32)
        idx += 2
        z = x * bn_scale + bn_shift
        z_ref[...] = z.astype(z_ref.dtype)

        # ---- Decoder: Linear layers, LeakyReLU(0.1) between all but the last.
        x = z
        for i in range(n_dec_lin):
            w = params[idx][...]
            b = params[idx + 1][...].astype(jnp.float32)
            idx += 2
            x = jnp.dot(x.astype(w.dtype), w,
                        preferred_element_type=jnp.float32) + b
            if i + 1 < n_dec_lin:
                x = jnp.maximum(x, 0.1 * x)     # LeakyReLU(0.1)
        recon_ref[...] = x.astype(recon_ref.dtype)

    return kernel


@functools.partial(jax.jit, static_argnames=("param_dtype",))
def engen_forward(x,
                  enc_weights, enc_biases,
                  bn_gamma, bn_beta, bn_mean, bn_var,
                  dec_weights, dec_biases,
                  *, param_dtype=jnp.float32, bn_eps=1e-5):
    """Fused EnGen forward: returns (recon_x, z).

    x:            (batch, in_dim)
    enc_weights:  list of (in, out) arrays — hidden encoder linears then the
                  final latent ('Z') linear (pre-transposed vs torch storage).
    enc_biases:   matching (out,) arrays.
    bn_*:         BatchNorm1d(latent) parameters / running statistics.
    dec_weights:  list of (in, out) arrays for the decoder MLP.
    dec_biases:   matching (out,) arrays.
    param_dtype:  dtype fed to the MXU (jnp.float32 or jnp.bfloat16).
    """
    n_enc = len(enc_weights)
    n_dec = len(dec_weights)
    batch, in_dim = x.shape
    latent = enc_weights[-1].shape[1]
    out_dim = dec_weights[-1].shape[1]
    out_dtype = x.dtype

    # ---- padded sizes: lane-dense features, sublane-aligned batch tile ----
    def fpad(d):
        return _round_up(d, _LANE)

    batch_p8 = _round_up(batch, _SUBLANE)
    tb = min(256, batch_p8)                  # 256-row tile when batch is large
    batch_p = _round_up(batch_p8, tb)

    in_p, lat_p, out_p = fpad(in_dim), fpad(latent), fpad(out_dim)

    # ---- fold BatchNorm (eval mode) into a scale/shift ----
    bn_scale = (bn_gamma.astype(jnp.float32)
                / jnp.sqrt(bn_var.astype(jnp.float32) + bn_eps))
    bn_shift = bn_beta.astype(jnp.float32) - bn_mean.astype(jnp.float32) * bn_scale

    args = []
    specs = []

    # x tile streams over the batch grid.
    args.append(_pad2d(x.astype(param_dtype), batch_p, in_p))
    specs.append(pl.BlockSpec((tb, in_p), lambda i: (i, 0)))

    def add_linear(w, b):
        ip, op = fpad(w.shape[0]), fpad(w.shape[1])
        args.append(_pad2d(w.astype(param_dtype), ip, op))
        specs.append(pl.BlockSpec((ip, op), lambda i: (0, 0)))   # VMEM-resident
        args.append(_pad2d(b.reshape(1, -1).astype(jnp.float32), 1, op))
        specs.append(pl.BlockSpec((1, op), lambda i: (0, 0)))

    for w, b in zip(enc_weights, enc_biases):
        add_linear(w, b)

    args.append(_pad2d(bn_scale.reshape(1, -1), 1, lat_p))
    specs.append(pl.BlockSpec((1, lat_p), lambda i: (0, 0)))
    args.append(_pad2d(bn_shift.reshape(1, -1), 1, lat_p))
    specs.append(pl.BlockSpec((1, lat_p), lambda i: (0, 0)))

    for w, b in zip(dec_weights, dec_biases):
        add_linear(w, b)

    out_shapes = (jax.ShapeDtypeStruct((batch_p, out_p), out_dtype),
                  jax.ShapeDtypeStruct((batch_p, lat_p), out_dtype))
    out_specs = (pl.BlockSpec((tb, out_p), lambda i: (i, 0)),
                 pl.BlockSpec((tb, lat_p), lambda i: (i, 0)))

    # ---- VMEM budget: raise the scoped limit only if resident params + I/O
    #      double-buffers won't fit the default. ----
    param_bytes = sum(int(a.size) * a.dtype.itemsize for a in args[1:])
    io_bytes = 2 * tb * (in_p * jnp.dtype(param_dtype).itemsize
                         + (out_p + lat_p) * jnp.dtype(out_dtype).itemsize)
    max_feat = max([in_p, lat_p, out_p]
                   + [fpad(w.shape[1]) for w in enc_weights + dec_weights])
    act_bytes = 4 * tb * max_feat * 4
    est = param_bytes + io_bytes + act_bytes + (4 << 20)
    vmem_limit = int(est) if est > (30 << 20) else None

    recon_p, z_p = pl.pallas_call(
        _make_engen_kernel(n_enc, n_dec),
        out_shape=out_shapes,
        grid=(batch_p // tb,),
        in_specs=specs,
        out_specs=out_specs,
        compiler_params=pltpu.CompilerParams(
            dimension_semantics=("parallel",),
            vmem_limit_bytes=vmem_limit,
        ),
    )(*args)

    return recon_p[:batch, :out_dim], z_p[:batch, :latent]


def _reference_forward(x, enc_weights, enc_biases,
                       bn_gamma, bn_beta, bn_mean, bn_var,
                       dec_weights, dec_biases, bn_eps=1e-5):
    """Plain-JAX reference matching the PyTorch EnGen forward (BN in eval mode)."""
    h = x.astype(jnp.float32)
    n_enc = len(enc_weights)
    for i, (w, b) in enumerate(zip(enc_weights, enc_biases)):
        h = jnp.dot(h, w.astype(jnp.float32),
                    preferred_element_type=jnp.float32) + b.astype(jnp.float32)
        if i + 1 < n_enc:
            h = jnp.where(h >= 0.0, h, 0.1 * h)
    z = ((h - bn_mean) / jnp.sqrt(bn_var + bn_eps)) * bn_gamma + bn_beta
    r = z
    n_dec = len(dec_weights)
    for i, (w, b) in enumerate(zip(dec_weights, dec_biases)):
        r = jnp.dot(r, w.astype(jnp.float32),
                    preferred_element_type=jnp.float32) + b.astype(jnp.float32)
        if i + 1 < n_dec:
            r = jnp.where(r >= 0.0, r, 0.1 * r)
    return r, z


if __name__ == "__main__":
    # EnGen(encoder_layer_sizes=[48, 32], latent_size=8,
    #       decoder_layer_sizes=[32, 64, 48])
    encoder_layer_sizes = [48, 32]
    latent_size = 8
    decoder_layer_sizes = [32, 64, 48]
    batch = 2

    key = jax.random.PRNGKey(0)
    key, xk = jax.random.split(key)
    x = jax.random.normal(xk, (batch, encoder_layer_sizes[0]), dtype=jnp.float32)

    # Encoder linear shapes: hidden layers, then the 'Z' linear to latent.
    enc_dims = list(zip(encoder_layer_sizes[:-1], encoder_layer_sizes[1:]))
    enc_dims.append((encoder_layer_sizes[-1], latent_size))
    # Decoder linear shapes.
    dec_dims = list(zip([latent_size] + decoder_layer_sizes[:-1],
                        decoder_layer_sizes))

    def make_params(key, dims):
        ws, bs = [], []
        for (din, dout) in dims:
            key, wk, bk = jax.random.split(key, 3)
            std = jnp.sqrt(jnp.float32(2.0 / din))     # EnGen init: N(0, sqrt(2/in))
            ws.append(std * jax.random.normal(wk, (din, dout), jnp.float32))
            bs.append(0.01 * jax.random.normal(bk, (dout,), jnp.float32))
        return key, ws, bs

    key, enc_ws, enc_bs = make_params(key, enc_dims)
    key, dec_ws, dec_bs = make_params(key, dec_dims)

    key, gk, btk, mk, vk = jax.random.split(key, 5)
    bn_gamma = 1.0 + 0.1 * jax.random.normal(gk, (latent_size,), jnp.float32)
    bn_beta = 0.05 * jax.random.normal(btk, (latent_size,), jnp.float32)
    bn_mean = 0.1 * jax.random.normal(mk, (latent_size,), jnp.float32)
    bn_var = 1.0 + 0.2 * jax.random.uniform(vk, (latent_size,), jnp.float32)

    ref_recon, ref_z = _reference_forward(
        x, enc_ws, enc_bs, bn_gamma, bn_beta, bn_mean, bn_var, dec_ws, dec_bs)

    # ---- f32 parameter path ----
    recon, z = engen_forward(
        x, enc_ws, enc_bs, bn_gamma, bn_beta, bn_mean, bn_var, dec_ws, dec_bs,
        param_dtype=jnp.float32)
    recon, z = jax.block_until_ready((recon, z))

    assert recon.shape == (batch, decoder_layer_sizes[-1]), recon.shape
    assert z.shape == (batch, latent_size), z.shape
    assert jnp.allclose(recon, ref_recon, atol=1e-4, rtol=1e-4), "recon mismatch (f32)"
    assert jnp.allclose(z, ref_z, atol=1e-4, rtol=1e-4), "z mismatch (f32)"

    # ---- bf16 parameter path (fast MXU dtype on v6e/v7x; f32 accumulation) ----
    recon_bf, z_bf = engen_forward(
        x, enc_ws, enc_bs, bn_gamma, bn_beta, bn_mean, bn_var, dec_ws, dec_bs,
        param_dtype=jnp.bfloat16)
    recon_bf, z_bf = jax.block_until_ready((recon_bf, z_bf))

    assert jnp.allclose(recon_bf, ref_recon, atol=0.15, rtol=0.1), "recon mismatch (bf16)"
    assert jnp.allclose(z_bf, ref_z, atol=0.15, rtol=0.1), "z mismatch (bf16)"

    print("KERNEL_OK")
</pallas_src>

<mosaic_0001>
module attributes {stable_mosaic.version = 11 : i64} {
  func.func @kernel(%arg0: i32, %arg1: memref<8x128xf32, #tpu.memory_space<vmem>>, %arg2: memref<128x128xf32, #tpu.memory_space<vmem>>, %arg3: memref<1x128xf32, #tpu.memory_space<vmem>>, %arg4: memref<128x128xf32, #tpu.memory_space<vmem>>, %arg5: memref<1x128xf32, #tpu.memory_space<vmem>>, %arg6: memref<1x128xf32, #tpu.memory_space<vmem>>, %arg7: memref<1x128xf32, #tpu.memory_space<vmem>>, %arg8: memref<128x128xf32, #tpu.memory_space<vmem>>, %arg9: memref<1x128xf32, #tpu.memory_space<vmem>>, %arg10: memref<128x128xf32, #tpu.memory_space<vmem>>, %arg11: memref<1x128xf32, #tpu.memory_space<vmem>>, %arg12: memref<128x128xf32, #tpu.memory_space<vmem>>, %arg13: memref<1x128xf32, #tpu.memory_space<vmem>>, %arg14: memref<8x128xf32, #tpu.memory_space<vmem>>, %arg15: memref<8x128xf32, #tpu.memory_space<vmem>>) attributes {dimension_semantics = [#tpu.dimension_semantics<parallel>], iteration_bounds = array<i64: 1>, scalar_prefetch = 0 : i64, scratch_operands = 0 : i64, tpu.core_type = #tpu.core_type<tc>, window_params = [{transform_indices = @transform_0, window_bounds = array<i64: 8, 128>}, {pipeline_mode = #tpu.pipeline_mode<synchronous>, transform_indices = @transform_1, window_bounds = array<i64: 128, 128>}, {pipeline_mode = #tpu.pipeline_mode<synchronous>, transform_indices = @transform_2, window_bounds = array<i64: 1, 128>}, {pipeline_mode = #tpu.pipeline_mode<synchronous>, transform_indices = @transform_3, window_bounds = array<i64: 128, 128>}, {pipeline_mode = #tpu.pipeline_mode<synchronous>, transform_indices = @transform_4, window_bounds = array<i64: 1, 128>}, {pipeline_mode = #tpu.pipeline_mode<synchronous>, transform_indices = @transform_5, window_bounds = array<i64: 1, 128>}, {pipeline_mode = #tpu.pipeline_mode<synchronous>, transform_indices = @transform_6, window_bounds = array<i64: 1, 128>}, {pipeline_mode = #tpu.pipeline_mode<synchronous>, transform_indices = @transform_7, window_bounds = array<i64: 128, 128>}, {pipeline_mode = #tpu.pipeline_mode<synchronous>, transform_indices = @transform_8, window_bounds = array<i64: 1, 128>}, {pipeline_mode = #tpu.pipeline_mode<synchronous>, transform_indices = @transform_9, window_bounds = array<i64: 128, 128>}, {pipeline_mode = #tpu.pipeline_mode<synchronous>, transform_indices = @transform_10, window_bounds = array<i64: 1, 128>}, {pipeline_mode = #tpu.pipeline_mode<synchronous>, transform_indices = @transform_11, window_bounds = array<i64: 128, 128>}, {pipeline_mode = #tpu.pipeline_mode<synchronous>, transform_indices = @transform_12, window_bounds = array<i64: 1, 128>}, {transform_indices = @transform_13, window_bounds = array<i64: 8, 128>}, {transform_indices = @transform_14, window_bounds = array<i64: 8, 128>}]} {
    %c0 = arith.constant 0 : index
    %c0_0 = arith.constant 0 : index
    %0 = vector.load %arg1[%c0, %c0_0] : memref<8x128xf32, #tpu.memory_space<vmem>>, vector<8x128xf32>
    %c0_1 = arith.constant 0 : index
    %c0_2 = arith.constant 0 : index
    %1 = vector.load %arg2[%c0_1, %c0_2] : memref<128x128xf32, #tpu.memory_space<vmem>>, vector<128x128xf32>
    %c0_3 = arith.constant 0 : index
    %c0_4 = arith.constant 0 : index
    %2 = vector.load %arg3[%c0_3, %c0_4] : memref<1x128xf32, #tpu.memory_space<vmem>>, vector<1x128xf32>
    %cst = arith.constant dense<0.000000e+00> : vector<8x128xf32>
    %3 = tpu.matmul %0, %1, %cst {dimension_numbers = #tpu.dot_dimension_numbers<[1], [0], [0], [1], [0, 0, 1, 1], [], []>} : vector<8x128xf32>, vector<128x128xf32>, vector<8x128xf32> -> vector<8x128xf32>
    %4 = vector.broadcast %2 : vector<1x128xf32> to vector<8x128xf32>
    %5 = arith.addf %3, %4 : vector<8x128xf32>
    %cst_5 = arith.constant 1.000000e-01 : f32
    %6 = vector.broadcast %cst_5 : f32 to vector<8x128xf32>
    %7 = arith.mulf %6, %5 : vector<8x128xf32>
    %8 = arith.maximumf %5, %7 : vector<8x128xf32>
    %c0_6 = arith.constant 0 : index
    %c0_7 = arith.constant 0 : index
    %9 = vector.load %arg4[%c0_6, %c0_7] : memref<128x128xf32, #tpu.memory_space<vmem>>, vector<128x128xf32>
    %c0_8 = arith.constant 0 : index
    %c0_9 = arith.constant 0 : index
    %10 = vector.load %arg5[%c0_8, %c0_9] : memref<1x128xf32, #tpu.memory_space<vmem>>, vector<1x128xf32>
    %cst_10 = arith.constant dense<0.000000e+00> : vector<8x128xf32>
    %11 = tpu.matmul %8, %9, %cst_10 {dimension_numbers = #tpu.dot_dimension_numbers<[1], [0], [0], [1], [0, 0, 1, 1], [], []>} : vector<8x128xf32>, vector<128x128xf32>, vector<8x128xf32> -> vector<8x128xf32>
    %12 = vector.broadcast %10 : vector<1x128xf32> to vector<8x128xf32>
    %13 = arith.addf %11, %12 : vector<8x128xf32>
    %c0_11 = arith.constant 0 : index
    %c0_12 = arith.constant 0 : index
    %14 = vector.load %arg6[%c0_11, %c0_12] : memref<1x128xf32, #tpu.memory_space<vmem>>, vector<1x128xf32>
    %c0_13 = arith.constant 0 : index
    %c0_14 = arith.constant 0 : index
    %15 = vector.load %arg7[%c0_13, %c0_14] : memref<1x128xf32, #tpu.memory_space<vmem>>, vector<1x128xf32>
    %16 = vector.broadcast %14 : vector<1x128xf32> to vector<8x128xf32>
    %17 = arith.mulf %13, %16 : vector<8x128xf32>
    %18 = vector.broadcast %15 : vector<1x128xf32> to vector<8x128xf32>
    %19 = arith.addf %17, %18 : vector<8x128xf32>
    %c0_15 = arith.constant 0 : index
    %c0_16 = arith.constant 0 : index
    %20 = vector.load %arg15[%c0_15, %c0_16] : memref<8x128xf32, #tpu.memory_space<vmem>>, vector<8x128xf32>
    tpu.vector_store %arg15[%c0_15, %c0_16], %19 {strides = array<i32>} : memref<8x128xf32, #tpu.memory_space<vmem>>, vector<8x128xf32>,
    %c0_17 = arith.constant 0 : index
    %c0_18 = arith.constant 0 : index
    %21 = vector.load %arg8[%c0_17, %c0_18] : memref<128x128xf32, #tpu.memory_space<vmem>>, vector<128x128xf32>
    %c0_19 = arith.constant 0 : index
    %c0_20 = arith.constant 0 : index
    %22 = vector.load %arg9[%c0_19, %c0_20] : memref<1x128xf32, #tpu.memory_space<vmem>>, vector<1x128xf32>
    %cst_21 = arith.constant dense<0.000000e+00> : vector<8x128xf32>
    %23 = tpu.matmul %19, %21, %cst_21 {dimension_numbers = #tpu.dot_dimension_numbers<[1], [0], [0], [1], [0, 0, 1, 1], [], []>} : vector<8x128xf32>, vector<128x128xf32>, vector<8x128xf32> -> vector<8x128xf32>
    %24 = vector.broadcast %22 : vector<1x128xf32> to vector<8x128xf32>
    %25 = arith.addf %23, %24 : vector<8x128xf32>
    %cst_22 = arith.constant 1.000000e-01 : f32
    %26 = vector.broadcast %cst_22 : f32 to vector<8x128xf32>
    %27 = arith.mulf %26, %25 : vector<8x128xf32>
    %28 = arith.maximumf %25, %27 : vector<8x128xf32>
    %c0_23 = arith.constant 0 : index
    %c0_24 = arith.constant 0 : index
    %29 = vector.load %arg10[%c0_23, %c0_24] : memref<128x128xf32, #tpu.memory_space<vmem>>, vector<128x128xf32>
    %c0_25 = arith.constant 0 : index
    %c0_26 = arith.constant 0 : index
    %30 = vector.load %arg11[%c0_25, %c0_26] : memref<1x128xf32, #tpu.memory_space<vmem>>, vector<1x128xf32>
    %cst_27 = arith.constant dense<0.000000e+00> : vector<8x128xf32>
    %31 = tpu.matmul %28, %29, %cst_27 {dimension_numbers = #tpu.dot_dimension_numbers<[1], [0], [0], [1], [0, 0, 1, 1], [], []>} : vector<8x128xf32>, vector<128x128xf32>, vector<8x128xf32> -> vector<8x128xf32>
    %32 = vector.broadcast %30 : vector<1x128xf32> to vector<8x128xf32>
    %33 = arith.addf %31, %32 : vector<8x128xf32>
    %cst_28 = arith.constant 1.000000e-01 : f32
    %34 = vector.broadcast %cst_28 : f32 to vector<8x128xf32>
    %35 = arith.mulf %34, %33 : vector<8x128xf32>
    %36 = arith.maximumf %33, %35 : vector<8x128xf32>
    %c0_29 = arith.constant 0 : index
    %c0_30 = arith.constant 0 : index
    %37 = vector.load %arg12[%c0_29, %c0_30] : memref<128x128xf32, #tpu.memory_space<vmem>>, vector<128x128xf32>
    %c0_31 = arith.constant 0 : index
    %c0_32 = arith.constant 0 : index
    %38 = vector.load %arg13[%c0_31, %c0_32] : memref<1x128xf32, #tpu.memory_space<vmem>>, vector<1x128xf32>
    %cst_33 = arith.constant dense<0.000000e+00> : vector<8x128xf32>
    %39 = tpu.matmul %36, %37, %cst_33 {dimension_numbers = #tpu.dot_dimension_numbers<[1], [0], [0], [1], [0, 0, 1, 1], [], []>} : vector<8x128xf32>, vector<128x128xf32>, vector<8x128xf32> -> vector<8x128xf32>
    %40 = vector.broadcast %38 : vector<1x128xf32> to vector<8x128xf32>
    %41 = arith.addf %39, %40 : vector<8x128xf32>
    %c0_34 = arith.constant 0 : index
    %c0_35 = arith.constant 0 : index
    %42 = vector.load %arg14[%c0_34, %c0_35] : memref<8x128xf32, #tpu.memory_space<vmem>>, vector<8x128xf32>
    tpu.vector_store %arg14[%c0_34, %c0_35], %41 {strides = array<i32>} : memref<8x128xf32, #tpu.memory_space<vmem>>, vector<8x128xf32>,
    return
  }
  func.func @transform_0(%arg0: i32) -> (i32, i32) {
    %c0_i32 = arith.constant 0 : i32
    %c0_i32_0 = arith.constant 0 : i32
    return %arg0, %c0_i32 : i32, i32
  }
  func.func @transform_1(%arg0: i32) -> (i32, i32) {
    %c0_i32 = arith.constant 0 : i32
    %c0_i32_0 = arith.constant 0 : i32
    %c0_i32_1 = arith.constant 0 : i32
    return %c0_i32, %c0_i32_0 : i32, i32
  }
  func.func @transform_2(%arg0: i32) -> (i32, i32) {
    %c0_i32 = arith.constant 0 : i32
    %c0_i32_0 = arith.constant 0 : i32
    %c0_i32_1 = arith.constant 0 : i32
    return %c0_i32, %c0_i32_0 : i32, i32
  }
  func.func @transform_3(%arg0: i32) -> (i32, i32) {
    %c0_i32 = arith.constant 0 : i32
    %c0_i32_0 = arith.constant 0 : i32
    %c0_i32_1 = arith.constant 0 : i32
    return %c0_i32, %c0_i32_0 : i32, i32
  }
  func.func @transform_4(%arg0: i32) -> (i32, i32) {
    %c0_i32 = arith.constant 0 : i32
    %c0_i32_0 = arith.constant 0 : i32
    %c0_i32_1 = arith.constant 0 : i32
    return %c0_i32, %c0_i32_0 : i32, i32
  }
  func.func @transform_5(%arg0: i32) -> (i32, i32) {
    %c0_i32 = arith.constant 0 : i32
    %c0_i32_0 = arith.constant 0 : i32
    %c0_i32_1 = arith.constant 0 : i32
    return %c0_i32, %c0_i32_0 : i32, i32
  }
  func.func @transform_6(%arg0: i32) -> (i32, i32) {
    %c0_i32 = arith.constant 0 : i32
    %c0_i32_0 = arith.constant 0 : i32
    %c0_i32_1 = arith.constant 0 : i32
    return %c0_i32, %c0_i32_0 : i32, i32
  }
  func.func @transform_7(%arg0: i32) -> (i32, i32) {
    %c0_i32 = arith.constant 0 : i32
    %c0_i32_0 = arith.constant 0 : i32
    %c0_i32_1 = arith.constant 0 : i32
    return %c0_i32, %c0_i32_0 : i32, i32
  }
  func.func @transform_8(%arg0: i32) -> (i32, i32) {
    %c0_i32 = arith.constant 0 : i32
    %c0_i32_0 = arith.constant 0 : i32
    %c0_i32_1 = arith.constant 0 : i32
    return %c0_i32, %c0_i32_0 : i32, i32
  }
  func.func @transform_9(%arg0: i32) -> (i32, i32) {
    %c0_i32 = arith.constant 0 : i32
    %c0_i32_0 = arith.constant 0 : i32
    %c0_i32_1 = arith.constant 0 : i32
    return %c0_i32, %c0_i32_0 : i32, i32
  }
  func.func @transform_10(%arg0: i32) -> (i32, i32) {
    %c0_i32 = arith.constant 0 : i32
    %c0_i32_0 = arith.constant 0 : i32
    %c0_i32_1 = arith.constant 0 : i32
    return %c0_i32, %c0_i32_0 : i32, i32
  }
  func.func @transform_11(%arg0: i32) -> (i32, i32) {
    %c0_i32 = arith.constant 0 : i32
    %c0_i32_0 = arith.constant 0 : i32
    %c0_i32_1 = arith.constant 0 : i32
    return %c0_i32, %c0_i32_0 : i32, i32
  }
  func.func @transform_12(%arg0: i32) -> (i32, i32) {
    %c0_i32 = arith.constant 0 : i32
    %c0_i32_0 = arith.constant 0 : i32
    %c0_i32_1 = arith.constant 0 : i32
    return %c0_i32, %c0_i32_0 : i32, i32
  }
  func.func @transform_13(%arg0: i32) -> (i32, i32) {
    %c0_i32 = arith.constant 0 : i32
    %c0_i32_0 = arith.constant 0 : i32
    return %arg0, %c0_i32 : i32, i32
  }
  func.func @transform_14(%arg0: i32) -> (i32, i32) {
    %c0_i32 = arith.constant 0 : i32
    %c0_i32_0 = arith.constant 0 : i32
    return %arg0, %c0_i32 : i32, i32
  }
}

</mosaic_0001>

<llo_original>
// kernel: engen_forward.1
$region0: #{engen_forward.1}
  #allocation0 [shape = 'u32[]', space=smem, size = 0x4, offset = 0x4, fixed_abs, tag = 'smem constant byte address 0x4 - core index']
  #allocation1 [shape = 'u32[144,128]{1,0:T(1,128)}', space=vmem, size = 0x12000, scoped, tag = 'internal scratch']
  %s0 = inlined_call_operand.vmem [shape: f32[8,128], index: 0, kind: input, shape index: {}]
  %s1 = inlined_call_operand.vmem [shape: f32[128,128], index: 1, kind: input, shape index: {}]
  %s2 = inlined_call_operand.vmem [shape: f32[1,128], index: 2, kind: input, shape index: {}]
  %s3 = inlined_call_operand.vmem [shape: f32[128,128], index: 3, kind: input, shape index: {}]
  %s4 = inlined_call_operand.vmem [shape: f32[1,128], index: 4, kind: input, shape index: {}]
  %s5 = inlined_call_operand.vmem [shape: f32[1,128], index: 5, kind: input, shape index: {}]
  %s6 = inlined_call_operand.vmem [shape: f32[1,128], index: 6, kind: input, shape index: {}]
  %s7 = inlined_call_operand.vmem [shape: f32[128,128], index: 7, kind: input, shape index: {}]
  %s8 = inlined_call_operand.vmem [shape: f32[1,128], index: 8, kind: input, shape index: {}]
  %s9 = inlined_call_operand.vmem [shape: f32[128,128], index: 9, kind: input, shape index: {}]
  %s10 = inlined_call_operand.vmem [shape: f32[1,128], index: 10, kind: input, shape index: {}]
  %s11 = inlined_call_operand.vmem [shape: f32[128,128], index: 11, kind: input, shape index: {}]
  %s12 = inlined_call_operand.vmem [shape: f32[1,128], index: 12, kind: input, shape index: {}]
  %s13 = inlined_call_operand.vmem [shape: f32[8,128], index: 13, kind: output, shape index: {0}]
  %s14 = inlined_call_operand.vmem [shape: f32[8,128], index: 14, kind: output, shape index: {1}]
  %15 = xla_tuple %s13, %s14
  %s16 = sld [smem:[#allocation0]]
  $region70: #{engen_forward.1} parent=0
    _
  %s18 = ssub.s32 1, %s16
  %s19 = scalar_select 0, %s18, %s16
  // Predicated region
  $region2: #{engen_forward.1} parent=0 // pred_check
    _
  $region3: #{engen_forward.1} parent=0 // pred_check_branch
    %21 = sbr.rel (0) target = $region5
  $region4: #{engen_forward.1} parent=0 // pred_region
    _
  $region5: #{engen_forward.1} parent=0 // pred_fallthru
    _
  // Predicated region
  $region6: #{engen_forward.1} parent=0 // pred_check
    _
  $region7: #{engen_forward.1} parent=0 // pred_check_branch
    %23 = sbr.rel (0) target = $region9
  $region8: #{engen_forward.1} parent=0 // pred_region
    _
  $region9: #{engen_forward.1} parent=0 // pred_fallthru
    _
  // Predicated region
  $region10: #{engen_forward.1} parent=0 // pred_check
    _
  $region11: #{engen_forward.1} parent=0 // pred_check_branch
    %25 = sbr.rel (0) target = $region13
  $region12: #{engen_forward.1} parent=0 // pred_region
    _
  $region13: #{engen_forward.1} parent=0 // pred_fallthru
    _
  // Predicated region
  $region14: #{engen_forward.1} parent=0 // pred_check
    _
  $region15: #{engen_forward.1} parent=0 // pred_check_branch
    %27 = sbr.rel (0) target = $region17
  $region16: #{engen_forward.1} parent=0 // pred_region
    _
  $region17: #{engen_forward.1} parent=0 // pred_fallthru
    _
  // Predicated region
  $region18: #{engen_forward.1} parent=0 // pred_check
    _
  $region19: #{engen_forward.1} parent=0 // pred_check_branch
    %29 = sbr.rel (0) target = $region21
  $region20: #{engen_forward.1} parent=0 // pred_region
    _
  $region21: #{engen_forward.1} parent=0 // pred_fallthru
    _
  // Predicated region
  $region22: #{engen_forward.1} parent=0 // pred_check
    _
  $region23: #{engen_forward.1} parent=0 // pred_check_branch
    %31 = sbr.rel (0) target = $region25
  $region24: #{engen_forward.1} parent=0 // pred_region
    _
  $region25: #{engen_forward.1} parent=0 // pred_fallthru
    _
  // Predicated region
  $region26: #{engen_forward.1} parent=0 // pred_check
    _
  $region27: #{engen_forward.1} parent=0 // pred_check_branch
    %33 = sbr.rel (0) target = $region29
  $region28: #{engen_forward.1} parent=0 // pred_region
    _
  $region29: #{engen_forward.1} parent=0 // pred_fallthru
    _
  // Predicated region
  $region30: #{engen_forward.1} parent=0 // pred_check
    _
  $region31: #{engen_forward.1} parent=0 // pred_check_branch
    %35 = sbr.rel (0) target = $region33
  $region32: #{engen_forward.1} parent=0 // pred_region
    _
  $region33: #{engen_forward.1} parent=0 // pred_fallthru
    _
  // Predicated region
  $region34: #{engen_forward.1} parent=0 // pred_check
    _
  $region35: #{engen_forward.1} parent=0 // pred_check_branch
    %37 = sbr.rel (0) target = $region37
  $region36: #{engen_forward.1} parent=0 // pred_region
    _
  $region37: #{engen_forward.1} parent=0 // pred_fallthru
    _
  // Predicated region
  $region38: #{engen_forward.1} parent=0 // pred_check
    _
  $region39: #{engen_forward.1} parent=0 // pred_check_branch
    %39 = sbr.rel (0) target = $region41
  $region40: #{engen_forward.1} parent=0 // pred_region
    _
  $region41: #{engen_forward.1} parent=0 // pred_fallthru
    _
  // Predicated region
  $region42: #{engen_forward.1} parent=0 // pred_check
    _
  $region43: #{engen_forward.1} parent=0 // pred_check_branch
    %41 = sbr.rel (0) target = $region45
  $region44: #{engen_forward.1} parent=0 // pred_region
    _
  $region45: #{engen_forward.1} parent=0 // pred_fallthru
    _
  // Predicated region
  $region46: #{engen_forward.1} parent=0 // pred_check
    _
  $region47: #{engen_forward.1} parent=0 // pred_check_branch
    %43 = sbr.rel (0) target = $region49
  $region48: #{engen_forward.1} parent=0 // pred_region
    _
  $region49: #{engen_forward.1} parent=0 // pred_fallthru
    _
  // Predicated region
  $region50: #{engen_forward.1} parent=0 // pred_check
    _
  $region51: #{engen_forward.1} parent=0 // pred_check_branch
    %45 = sbr.rel (0) target = $region53
  $region52: #{engen_forward.1} parent=0 // pred_region
    _
  $region53: #{engen_forward.1} parent=0 // pred_fallthru
    _
  %v46 = vld [vmem:[%s0] sm:$0xff]
  %v47 = vld [vmem:[%s1] sm:$0xff]
  %v48 = vld [vmem:[%s1 + $0x8] sm:$0xff]
  %v49 = vld [vmem:[%s1 + $0x10] sm:$0xff]
  %v50 = vld [vmem:[%s1 + $0x18] sm:$0xff]
  %v51 = vld [vmem:[%s1 + $0x20] sm:$0xff]
  %v52 = vld [vmem:[%s1 + $0x28] sm:$0xff]
  %v53 = vld [vmem:[%s1 + $0x30] sm:$0xff]
  %v54 = vld [vmem:[%s1 + $0x38] sm:$0xff]
  %v55 = vld [vmem:[%s1 + $0x40] sm:$0xff]
  %v56 = vld [vmem:[%s1 + $0x48] sm:$0xff]
  %v57 = vld [vmem:[%s1 + $0x50] sm:$0xff]
  %v58 = vld [vmem:[%s1 + $0x58] sm:$0xff]
  %v59 = vld [vmem:[%s1 + $0x60] sm:$0xff]
  %v60 = vld [vmem:[%s1 + $0x68] sm:$0xff]
  %v61 = vld [vmem:[%s1 + $0x70] sm:$0xff]
  %v62 = vld [vmem:[%s1 + $0x78] sm:$0xff]
  %v63 = vld [vmem:[%s2] sm:$0x1]
  %v65 = vlaneseq
  %v66 = vshrl.u32 %v65, 7
  %v67 = vsub.s32 0, %v66
  %v68 = vrot.slane %v63, %v67
  %70 = vmatprep.subr.mxu0 0.0
  %71 = vmatpush1.msra.mxu0 %v47
  %72 = vmatprep.subr.mxu0 0.0
  %73 = vmatpush1.msra.mxu0 %v48
  %74 = vmatprep.subr.mxu0 0.0
  %75 = vmatpush1.msra.mxu0 %v49
  %76 = vmatprep.subr.mxu0 0.0
  %77 = vmatpush1.msra.mxu0 %v50
  %78 = vmatprep.subr.mxu0 0.0
  %79 = vmatpush1.msra.mxu0 %v51
  %80 = vmatprep.subr.mxu0 0.0
  %81 = vmatpush1.msra.mxu0 %v52
  %82 = vmatprep.subr.mxu0 0.0
  %83 = vmatpush1.msra.mxu0 %v53
  %84 = vmatprep.subr.mxu0 0.0
  %85 = vmatpush1.msra.mxu0 %v54
  %86 = vmatprep.subr.mxu0 0.0
  %87 = vmatpush1.msra.mxu0 %v55
  %88 = vmatprep.subr.mxu0 0.0
  %89 = vmatpush1.msra.mxu0 %v56
  %90 = vmatprep.subr.mxu0 0.0
  %91 = vmatpush1.msra.mxu0 %v57
  %92 = vmatprep.subr.mxu0 0.0
  %93 = vmatpush1.msra.mxu0 %v58
  %94 = vmatprep.subr.mxu0 0.0
  %95 = vmatpush1.msra.mxu0 %v59
  %96 = vmatprep.subr.mxu0 0.0
  %97 = vmatpush1.msra.mxu0 %v60
  %98 = vmatprep.subr.mxu0 0.0
  %99 = vmatpush1.msra.mxu0 %v61
  %100 = vmatprep.subr.mxu0 0.0
  %101 = vmatpush1.msra.mxu0 %v62
  %102 = vmatprep.subr.mxu0 0.0
  %103 = vmatpush1.msra.mxu0 0.0
  %104 = vmatprep.subr.mxu0 0.0
  %105 = vmatpush1.msra.mxu0 0.0
  %106 = vmatprep.subr.mxu0 0.0
  %107 = vmatpush1.msra.mxu0 0.0
  %108 = vmatprep.subr.mxu0 0.0
  %109 = vmatpush1.msra.mxu0 0.0
  %110 = vmatprep.subr.mxu0 0.0
  %111 = vmatpush1.msra.mxu0 0.0
  %112 = vmatprep.subr.mxu0 0.0
  %113 = vmatpush1.msra.mxu0 0.0
  %114 = vmatprep.subr.mxu0 0.0
  %115 = vmatpush1.msra.mxu0 0.0
  %116 = vmatprep.subr.mxu0 0.0
  %117 = vmatpush1.msra.mxu0 0.0
  %118 = vmatprep.subr.mxu0 0.0
  %119 = vmatpush1.msra.mxu0 0.0
  %120 = vmatprep.subr.mxu0 0.0
  %121 = vmatpush1.msra.mxu0 0.0
  %122 = vmatprep.subr.mxu0 0.0
  %123 = vmatpush1.msra.mxu0 0.0
  %124 = vmatprep.subr.mxu0 0.0
  %125 = vmatpush1.msra.mxu0 0.0
  %126 = vmatprep.subr.mxu0 0.0
  %127 = vmatpush1.msra.mxu0 0.0
  %128 = vmatprep.subr.mxu0 0.0
  %129 = vmatpush1.msra.mxu0 0.0
  %130 = vmatprep.subr.mxu0 0.0
  %131 = vmatpush1.msra.mxu0 0.0
  %132 = vmatprep.subr.mxu0 0.0
  %133 = vmatpush1.msra.mxu0 0.0
  %134 = vmatprep.mubr.f32.mxu0 0.0
  %135 = vmatmul.mubr.f32.gmra.mrb[0].mxu0 %v46
  %v136 = vpop.f32.mrb[0].mxu0
  %v137 = vadd.f32 %v68, %v136
  %v138 = vpop.f32.mrb[0].mxu0
  %139 = vdwg.mxu0
  %v140 = vmul.f32 %v137, 0.1
  %v141 = vmax.f32 %v137, %v140
  %v142 = vld [vmem:[%s3] sm:$0xff]
  %v143 = vld [vmem:[%s3 + $0x8] sm:$0xff]
  %v144 = vld [vmem:[%s3 + $0x10] sm:$0xff]
  %v145 = vld [vmem:[%s3 + $0x18] sm:$0xff]
  %v146 = vld [vmem:[%s3 + $0x20] sm:$0xff]
  %v147 = vld [vmem:[%s3 + $0x28] sm:$0xff]
  %v148 = vld [vmem:[%s3 + $0x30] sm:$0xff]
  %v149 = vld [vmem:[%s3 + $0x38] sm:$0xff]
  %v150 = vld [vmem:[%s3 + $0x40] sm:$0xff]
  %v151 = vld [vmem:[%s3 + $0x48] sm:$0xff]
  %v152 = vld [vmem:[%s3 + $0x50] sm:$0xff]
  %v153 = vld [vmem:[%s3 + $0x58] sm:$0xff]
  %v154 = vld [vmem:[%s3 + $0x60] sm:$0xff]
  %v155 = vld [vmem:[%s3 + $0x68] sm:$0xff]
  %v156 = vld [vmem:[%s3 + $0x70] sm:$0xff]
  %v157 = vld [vmem:[%s3 + $0x78] sm:$0xff]
  %v158 = vld [vmem:[%s4] sm:$0x1]
  %v160 = vlaneseq
  %v161 = vshrl.u32 %v160, 7
  %v162 = vsub.s32 0, %v161
  %v163 = vrot.slane %v158, %v162
  %165 = vmatprep.subr.mxu0 0.0
  %166 = vmatpush1.msra.mxu0 %v142
  %167 = vmatprep.subr.mxu0 0.0
  %168 = vmatpush1.msra.mxu0 %v143
  %169 = vmatprep.subr.mxu0 0.0
  %170 = vmatpush1.msra.mxu0 %v144
  %171 = vmatprep.subr.mxu0 0.0
  %172 = vmatpush1.msra.mxu0 %v145
  %173 = vmatprep.subr.mxu0 0.0
  %174 = vmatpush1.msra.mxu0 %v146
  %175 = vmatprep.subr.mxu0 0.0
  %176 = vmatpush1.msra.mxu0 %v147
  %177 = vmatprep.subr.mxu0 0.0
  %178 = vmatpush1.msra.mxu0 %v148
  %179 = vmatprep.subr.mxu0 0.0
  %180 = vmatpush1.msra.mxu0 %v149
  %181 = vmatprep.subr.mxu0 0.0
  %182 = vmatpush1.msra.mxu0 %v150
  %183 = vmatprep.subr.mxu0 0.0
  %184 = vmatpush1.msra.mxu0 %v151
  %185 = vmatprep.subr.mxu0 0.0
  %186 = vmatpush1.msra.mxu0 %v152
  %187 = vmatprep.subr.mxu0 0.0
  %188 = vmatpush1.msra.mxu0 %v153
  %189 = vmatprep.subr.mxu0 0.0
  %190 = vmatpush1.msra.mxu0 %v154
  %191 = vmatprep.subr.mxu0 0.0
  %192 = vmatpush1.msra.mxu0 %v155
  %193 = vmatprep.subr.mxu0 0.0
  %194 = vmatpush1.msra.mxu0 %v156
  %195 = vmatprep.subr.mxu0 0.0
  %196 = vmatpush1.msra.mxu0 %v157
  %197 = vmatprep.subr.mxu0 0.0
  %198 = vmatpush1.msra.mxu0 0.0
  %199 = vmatprep.subr.mxu0 0.0
  %200 = vmatpush1.msra.mxu0 0.0
  %201 = vmatprep.subr.mxu0 0.0
  %202 = vmatpush1.msra.mxu0 0.0
  %203 = vmatprep.subr.mxu0 0.0
  %204 = vmatpush1.msra.mxu0 0.0
  %205 = vmatprep.subr.mxu0 0.0
  %206 = vmatpush1.msra.mxu0 0.0
  %207 = vmatprep.subr.mxu0 0.0
  %208 = vmatpush1.msra.mxu0 0.0
  %209 = vmatprep.subr.mxu0 0.0
  %210 = vmatpush1.msra.mxu0 0.0
  %211 = vmatprep.subr.mxu0 0.0
  %212 = vmatpush1.msra.mxu0 0.0
  %213 = vmatprep.subr.mxu0 0.0
  %214 = vmatpush1.msra.mxu0 0.0
  %215 = vmatprep.subr.mxu0 0.0
  %216 = vmatpush1.msra.mxu0 0.0
  %217 = vmatprep.subr.mxu0 0.0
  %218 = vmatpush1.msra.mxu0 0.0
  %219 = vmatprep.subr.mxu0 0.0
  %220 = vmatpush1.msra.mxu0 0.0
  %221 = vmatprep.subr.mxu0 0.0
  %222 = vmatpush1.msra.mxu0 0.0
  %223 = vmatprep.subr.mxu0 0.0
  %224 = vmatpush1.msra.mxu0 0.0
  %225 = vmatprep.subr.mxu0 0.0
  %226 = vmatpush1.msra.mxu0 0.0
  %227 = vmatprep.subr.mxu0 0.0
  %228 = vmatpush1.msra.mxu0 0.0
  %229 = vmatprep.mubr.f32.mxu0 0.0
  %230 = vmatmul.mubr.f32.gmra.mrb[0].mxu0 %v141
  %v231 = vpop.f32.mrb[0].mxu0
  %v232 = vadd.f32 %v163, %v231
  %v233 = vpop.f32.mrb[0].mxu0
  %234 = vdwg.mxu0
  %v235 = vld [vmem:[%s5] sm:$0x1]
  %v236 = vld [vmem:[%s6] sm:$0x1]
  %v238 = vlaneseq
  %v239 = vshrl.u32 %v238, 7
  %v240 = vsub.s32 0, %v239
  %v241 = vrot.slane %v235, %v240
  %v243 = vmul.f32 %v232, %v241
  %v245 = vlaneseq
  %v246 = vshrl.u32 %v245, 7
  %v247 = vsub.s32 0, %v246
  %v248 = vrot.slane %v236, %v247
  %v250 = vadd.f32 %v243, %v248
  %251 = vst [vmem:[%s14] sm:$0xff] %v250
  %v252 = vld [vmem:[%s7] sm:$0xff]
  %v253 = vld [vmem:[%s7 + $0x8] sm:$0xff]
  %v254 = vld [vmem:[%s7 + $0x10] sm:$0xff]
  %v255 = vld [vmem:[%s7 + $0x18] sm:$0xff]
  %v256 = vld [vmem:[%s7 + $0x20] sm:$0xff]
  %v257 = vld [vmem:[%s7 + $0x28] sm:$0xff]
  %v258 = vld [vmem:[%s7 + $0x30] sm:$0xff]
  %v259 = vld [vmem:[%s7 + $0x38] sm:$0xff]
  %v260 = vld [vmem:[%s7 + $0x40] sm:$0xff]
  %v261 = vld [vmem:[%s7 + $0x48] sm:$0xff]
  %v262 = vld [vmem:[%s7 + $0x50] sm:$0xff]
  %v263 = vld [vmem:[%s7 + $0x58] sm:$0xff]
  %v264 = vld [vmem:[%s7 + $0x60] sm:$0xff]
  %v265 = vld [vmem:[%s7 + $0x68] sm:$0xff]
  %v266 = vld [vmem:[%s7 + $0x70] sm:$0xff]
  %v267 = vld [vmem:[%s7 + $0x78] sm:$0xff]
  %v268 = vld [vmem:[%s8] sm:$0x1]
  %v270 = vlaneseq
  %v271 = vshrl.u32 %v270, 7
  %v272 = vsub.s32 0, %v271
  %v273 = vrot.slane %v268, %v272
  %275 = vmatprep.subr.mxu0 0.0
  %276 = vmatpush1.msra.mxu0 %v252
  %277 = vmatprep.subr.mxu0 0.0
  %278 = vmatpush1.msra.mxu0 %v253
  %279 = vmatprep.subr.mxu0 0.0
  %280 = vmatpush1.msra.mxu0 %v254
  %281 = vmatprep.subr.mxu0 0.0
  %282 = vmatpush1.msra.mxu0 %v255
  %283 = vmatprep.subr.mxu0 0.0
  %284 = vmatpush1.msra.mxu0 %v256
  %285 = vmatprep.subr.mxu0 0.0
  %286 = vmatpush1.msra.mxu0 %v257
  %287 = vmatprep.subr.mxu0 0.0
  %288 = vmatpush1.msra.mxu0 %v258
  %289 = vmatprep.subr.mxu0 0.0
  %290 = vmatpush1.msra.mxu0 %v259
  %291 = vmatprep.subr.mxu0 0.0
  %292 = vmatpush1.msra.mxu0 %v260
  %293 = vmatprep.subr.mxu0 0.0
  %294 = vmatpush1.msra.mxu0 %v261
  %295 = vmatprep.subr.mxu0 0.0
  %296 = vmatpush1.msra.mxu0 %v262
  %297 = vmatprep.subr.mxu0 0.0
  %298 = vmatpush1.msra.mxu0 %v263
  %299 = vmatprep.subr.mxu0 0.0
  %300 = vmatpush1.msra.mxu0 %v264
  %301 = vmatprep.subr.mxu0 0.0
  %302 = vmatpush1.msra.mxu0 %v265
  %303 = vmatprep.subr.mxu0 0.0
  %304 = vmatpush1.msra.mxu0 %v266
  %305 = vmatprep.subr.mxu0 0.0
  %306 = vmatpush1.msra.mxu0 %v267
  %307 = vmatprep.subr.mxu0 0.0
  %308 = vmatpush1.msra.mxu0 0.0
  %309 = vmatprep.subr.mxu0 0.0
  %310 = vmatpush1.msra.mxu0 0.0
  %311 = vmatprep.subr.mxu0 0.0
  %312 = vmatpush1.msra.mxu0 0.0
  %313 = vmatprep.subr.mxu0 0.0
  %314 = vmatpush1.msra.mxu0 0.0
  %315 = vmatprep.subr.mxu0 0.0
  %316 = vmatpush1.msra.mxu0 0.0
  %317 = vmatprep.subr.mxu0 0.0
  %318 = vmatpush1.msra.mxu0 0.0
  %319 = vmatprep.subr.mxu0 0.0
  %320 = vmatpush1.msra.mxu0 0.0
  %321 = vmatprep.subr.mxu0 0.0
  %322 = vmatpush1.msra.mxu0 0.0
  %323 = vmatprep.subr.mxu0 0.0
  %324 = vmatpush1.msra.mxu0 0.0
  %325 = vmatprep.subr.mxu0 0.0
  %326 = vmatpush1.msra.mxu0 0.0
  %327 = vmatprep.subr.mxu0 0.0
  %328 = vmatpush1.msra.mxu0 0.0
  %329 = vmatprep.subr.mxu0 0.0
  %330 = vmatpush1.msra.mxu0 0.0
  %331 = vmatprep.subr.mxu0 0.0
  %332 = vmatpush1.msra.mxu0 0.0
  %333 = vmatprep.subr.mxu0 0.0
  %334 = vmatpush1.msra.mxu0 0.0
  %335 = vmatprep.subr.mxu0 0.0
  %336 = vmatpush1.msra.mxu0 0.0
  %337 = vmatprep.subr.mxu0 0.0
  %338 = vmatpush1.msra.mxu0 0.0
  %339 = vmatprep.mubr.f32.mxu0 0.0
  %340 = vmatmul.mubr.f32.gmra.mrb[0].mxu0 %v250
  %v341 = vpop.f32.mrb[0].mxu0
  %v342 = vadd.f32 %v273, %v341
  %v343 = vpop.f32.mrb[0].mxu0
  %344 = vdwg.mxu0
  %v345 = vmul.f32 %v342, 0.1
  %v346 = vmax.f32 %v342, %v345
  %v347 = vld [vmem:[%s9] sm:$0xff]
  %v348 = vld [vmem:[%s9 + $0x8] sm:$0xff]
  %v349 = vld [vmem:[%s9 + $0x10] sm:$0xff]
  %v350 = vld [vmem:[%s9 + $0x18] sm:$0xff]
  %v351 = vld [vmem:[%s9 + $0x20] sm:$0xff]
  %v352 = vld [vmem:[%s9 + $0x28] sm:$0xff]
  %v353 = vld [vmem:[%s9 + $0x30] sm:$0xff]
  %v354 = vld [vmem:[%s9 + $0x38] sm:$0xff]
  %v355 = vld [vmem:[%s9 + $0x40] sm:$0xff]
  %v356 = vld [vmem:[%s9 + $0x48] sm:$0xff]
  %v357 = vld [vmem:[%s9 + $0x50] sm:$0xff]
  %v358 = vld [vmem:[%s9 + $0x58] sm:$0xff]
  %v359 = vld [vmem:[%s9 + $0x60] sm:$0xff]
  %v360 = vld [vmem:[%s9 + $0x68] sm:$0xff]
  %v361 = vld [vmem:[%s9 + $0x70] sm:$0xff]
  %v362 = vld [vmem:[%s9 + $0x78] sm:$0xff]
  %v363 = vld [vmem:[%s10] sm:$0x1]
  %v365 = vlaneseq
  %v366 = vshrl.u32 %v365, 7
  %v367 = vsub.s32 0, %v366
  %v368 = vrot.slane %v363, %v367
  %370 = vmatprep.subr.mxu0 0.0
  %371 = vmatpush1.msra.mxu0 %v347
  %372 = vmatprep.subr.mxu0 0.0
  %373 = vmatpush1.msra.mxu0 %v348
  %374 = vmatprep.subr.mxu0 0.0
  %375 = vmatpush1.msra.mxu0 %v349
  %376 = vmatprep.subr.mxu0 0.0
  %377 = vmatpush1.msra.mxu0 %v350
  %378 = vmatprep.subr.mxu0 0.0
  %379 = vmatpush1.msra.mxu0 %v351
  %380 = vmatprep.subr.mxu0 0.0
  %381 = vmatpush1.msra.mxu0 %v352
  %382 = vmatprep.subr.mxu0 0.0
  %383 = vmatpush1.msra.mxu0 %v353
  %384 = vmatprep.subr.mxu0 0.0
  %385 = vmatpush1.msra.mxu0 %v354
  %386 = vmatprep.subr.mxu0 0.0
  %387 = vmatpush1.msra.mxu0 %v355
  %388 = vmatprep.subr.mxu0 0.0
  %389 = vmatpush1.msra.mxu0 %v356
  %390 = vmatprep.subr.mxu0 0.0
  %391 = vmatpush1.msra.mxu0 %v357
  %392 = vmatprep.subr.mxu0 0.0
  %393 = vmatpush1.msra.mxu0 %v358
  %394 = vmatprep.subr.mxu0 0.0
  %395 = vmatpush1.msra.mxu0 %v359
  %396 = vmatprep.subr.mxu0 0.0
  %397 = vmatpush1.msra.mxu0 %v360
  %398 = vmatprep.subr.mxu0 0.0
  %399 = vmatpush1.msra.mxu0 %v361
  %400 = vmatprep.subr.mxu0 0.0
  %401 = vmatpush1.msra.mxu0 %v362
  %402 = vmatprep.subr.mxu0 0.0
  %403 = vmatpush1.msra.mxu0 0.0
  %404 = vmatprep.subr.mxu0 0.0
  %405 = vmatpush1.msra.mxu0 0.0
  %406 = vmatprep.subr.mxu0 0.0
  %407 = vmatpush1.msra.mxu0 0.0
  %408 = vmatprep.subr.mxu0 0.0
  %409 = vmatpush1.msra.mxu0 0.0
  %410 = vmatprep.subr.mxu0 0.0
  %411 = vmatpush1.msra.mxu0 0.0
  %412 = vmatprep.subr.mxu0 0.0
  %413 = vmatpush1.msra.mxu0 0.0
  %414 = vmatprep.subr.mxu0 0.0
  %415 = vmatpush1.msra.mxu0 0.0
  %416 = vmatprep.subr.mxu0 0.0
  %417 = vmatpush1.msra.mxu0 0.0
  %418 = vmatprep.subr.mxu0 0.0
  %419 = vmatpush1.msra.mxu0 0.0
  %420 = vmatprep.subr.mxu0 0.0
  %421 = vmatpush1.msra.mxu0 0.0
  %422 = vmatprep.subr.mxu0 0.0
  %423 = vmatpush1.msra.mxu0 0.0
  %424 = vmatprep.subr.mxu0 0.0
  %425 = vmatpush1.msra.mxu0 0.0
  %426 = vmatprep.subr.mxu0 0.0
  %427 = vmatpush1.msra.mxu0 0.0
  %428 = vmatprep.subr.mxu0 0.0
  %429 = vmatpush1.msra.mxu0 0.0
  %430 = vmatprep.subr.mxu0 0.0
  %431 = vmatpush1.msra.mxu0 0.0
  %432 = vmatprep.subr.mxu0 0.0
  %433 = vmatpush1.msra.mxu0 0.0
  %434 = vmatprep.mubr.f32.mxu0 0.0
  %435 = vmatmul.mubr.f32.gmra.mrb[0].mxu0 %v346
  %v436 = vpop.f32.mrb[0].mxu0
  %v437 = vadd.f32 %v368, %v436
  %v438 = vpop.f32.mrb[0].mxu0
  %439 = vdwg.mxu0
  %v440 = vmul.f32 %v437, 0.1
  %v441 = vmax.f32 %v437, %v440
  %v442 = vld [vmem:[%s11] sm:$0xff]
  %v443 = vld [vmem:[%s11 + $0x8] sm:$0xff]
  %v444 = vld [vmem:[%s11 + $0x10] sm:$0xff]
  %v445 = vld [vmem:[%s11 + $0x18] sm:$0xff]
  %v446 = vld [vmem:[%s11 + $0x20] sm:$0xff]
  %v447 = vld [vmem:[%s11 + $0x28] sm:$0xff]
  %v448 = vld [vmem:[%s11 + $0x30] sm:$0xff]
  %v449 = vld [vmem:[%s11 + $0x38] sm:$0xff]
  %v450 = vld [vmem:[%s11 + $0x40] sm:$0xff]
  %v451 = vld [vmem:[%s11 + $0x48] sm:$0xff]
  %v452 = vld [vmem:[%s11 + $0x50] sm:$0xff]
  %v453 = vld [vmem:[%s11 + $0x58] sm:$0xff]
  %v454 = vld [vmem:[%s11 + $0x60] sm:$0xff]
  %v455 = vld [vmem:[%s11 + $0x68] sm:$0xff]
  %v456 = vld [vmem:[%s11 + $0x70] sm:$0xff]
  %v457 = vld [vmem:[%s11 + $0x78] sm:$0xff]
  %v458 = vld [vmem:[%s12] sm:$0x1]
  %v460 = vlaneseq
  %v461 = vshrl.u32 %v460, 7
  %v462 = vsub.s32 0, %v461
  %v463 = vrot.slane %v458, %v462
  %465 = vmatprep.subr.mxu0 0.0
  %466 = vmatpush1.msra.mxu0 %v442
  %467 = vmatprep.subr.mxu0 0.0
  %468 = vmatpush1.msra.mxu0 %v443
  %469 = vmatprep.subr.mxu0 0.0
  %470 = vmatpush1.msra.mxu0 %v444
  %471 = vmatprep.subr.mxu0 0.0
  %472 = vmatpush1.msra.mxu0 %v445
  %473 = vmatprep.subr.mxu0 0.0
  %474 = vmatpush1.msra.mxu0 %v446
  %475 = vmatprep.subr.mxu0 0.0
  %476 = vmatpush1.msra.mxu0 %v447
  %477 = vmatprep.subr.mxu0 0.0
  %478 = vmatpush1.msra.mxu0 %v448
  %479 = vmatprep.subr.mxu0 0.0
  %480 = vmatpush1.msra.mxu0 %v449
  %481 = vmatprep.subr.mxu0 0.0
  %482 = vmatpush1.msra.mxu0 %v450
  %483 = vmatprep.subr.mxu0 0.0
  %484 = vmatpush1.msra.mxu0 %v451
  %485 = vmatprep.subr.mxu0 0.0
  %486 = vmatpush1.msra.mxu0 %v452
  %487 = vmatprep.subr.mxu0 0.0
  %488 = vmatpush1.msra.mxu0 %v453
  %489 = vmatprep.subr.mxu0 0.0
  %490 = vmatpush1.msra.mxu0 %v454
  %491 = vmatprep.subr.mxu0 0.0
  %492 = vmatpush1.msra.mxu0 %v455
  %493 = vmatprep.subr.mxu0 0.0
  %494 = vmatpush1.msra.mxu0 %v456
  %495 = vmatprep.subr.mxu0 0.0
  %496 = vmatpush1.msra.mxu0 %v457
  %497 = vmatprep.subr.mxu0 0.0
  %498 = vmatpush1.msra.mxu0 0.0
  %499 = vmatprep.subr.mxu0 0.0
  %500 = vmatpush1.msra.mxu0 0.0
  %501 = vmatprep.subr.mxu0 0.0
  %502 = vmatpush1.msra.mxu0 0.0
  %503 = vmatprep.subr.mxu0 0.0
  %504 = vmatpush1.msra.mxu0 0.0
  %505 = vmatprep.subr.mxu0 0.0
  %506 = vmatpush1.msra.mxu0 0.0
  %507 = vmatprep.subr.mxu0 0.0
  %508 = vmatpush1.msra.mxu0 0.0
  %509 = vmatprep.subr.mxu0 0.0
  %510 = vmatpush1.msra.mxu0 0.0
  %511 = vmatprep.subr.mxu0 0.0
  %512 = vmatpush1.msra.mxu0 0.0
  %513 = vmatprep.subr.mxu0 0.0
  %514 = vmatpush1.msra.mxu0 0.0
  %515 = vmatprep.subr.mxu0 0.0
  %516 = vmatpush1.msra.mxu0 0.0
  %517 = vmatprep.subr.mxu0 0.0
  %518 = vmatpush1.msra.mxu0 0.0
  %519 = vmatprep.subr.mxu0 0.0
  %520 = vmatpush1.msra.mxu0 0.0
  %521 = vmatprep.subr.mxu0 0.0
  %522 = vmatpush1.msra.mxu0 0.0
  %523 = vmatprep.subr.mxu0 0.0
  %524 = vmatpush1.msra.mxu0 0.0
  %525 = vmatprep.subr.mxu0 0.0
  %526 = vmatpush1.msra.mxu0 0.0
  %527 = vmatprep.subr.mxu0 0.0
  %528 = vmatpush1.msra.mxu0 0.0
  %529 = vmatprep.mubr.f32.mxu0 0.0
  %530 = vmatmul.mubr.f32.gmra.mrb[0].mxu0 %v441
  %v531 = vpop.f32.mrb[0].mxu0
  %v532 = vadd.f32 %v463, %v531
  %v533 = vpop.f32.mrb[0].mxu0
  %534 = vdwg.mxu0
  %535 = vst [vmem:[%s13] sm:$0xff] %v532
  // Predicated region
  $region54: #{engen_forward.1} parent=0 // pred_check
    _
  $region55: #{engen_forward.1} parent=0 // pred_check_branch
    %537 = sbr.rel (0) target = $region57
  $region56: #{engen_forward.1} parent=0 // pred_region
    _
  $region57: #{engen_forward.1} parent=0 // pred_fallthru
    _
  // Predicated region
  $region58: #{engen_forward.1} parent=0 // pred_check
    _
  $region59: #{engen_forward.1} parent=0 // pred_check_branch
    %539 = sbr.rel (0) target = $region61
  $region60: #{engen_forward.1} parent=0 // pred_region
    _
  $region61: #{engen_forward.1} parent=0 // pred_fallthru
    _
  // Predicated region
  $region62: #{engen_forward.1} parent=0 // pred_check
    _
  $region63: #{engen_forward.1} parent=0 // pred_check_branch
    %541 = sbr.rel (0) target = $region65
  $region64: #{engen_forward.1} parent=0 // pred_region
    _
  $region65: #{engen_forward.1} parent=0 // pred_fallthru
    _
  // Predicated region
  $region66: #{engen_forward.1} parent=0 // pred_check
    _
  $region67: #{engen_forward.1} parent=0 // pred_check_branch
    %543 = sbr.rel (0) target = $region69
  $region68: #{engen_forward.1} parent=0 // pred_region
    _
  $region69: #{engen_forward.1} parent=0 // pred_fallthru
    _

</llo_original>
